<compile_context>
chip_gen: v6e
topology: v6e:2x2x1
jax: 0.10.0
libtpu: 0.0.40
codegen_flags: <defaults>
</compile_context>

<pallas_src>
import math
from functools import partial

import jax
import jax.numpy as jnp
from jax.experimental import pallas as pl
from jax.experimental.pallas import tpu as pltpu


def _attn_kernel(hb_ref, enc_ref, w2t_ref, v_ref, out_ref, *, tb, t):
    # hb_ref:  (TB, H)    f32  precomputed hidden @ W_h^T + bias for this batch tile
    # enc_ref: (TB*T, H)  bf16 flattened encoder outputs for this batch tile
    # w2t_ref: (H, H)     bf16 W_e^T (encoder half of the concat Linear)
    # v_ref:   (H, 1)     bf16 scoring vector as a column (MXU contraction)
    # out_ref: (TB, T)    f32  per-batch softmax attention weights (lane-dense)
    f32 = jnp.float32
    bf16 = jnp.bfloat16
    tbt = tb * t

    # ---- One-hot helpers generated in-kernel (cheap VPU work; no HBM traffic). ----
    # E[r, b] = 1 iff flattened row r belongs to batch b (r // t == b), written with
    # range comparisons so no integer div/mod is needed on the VPU.
    row_e = jax.lax.broadcasted_iota(jnp.int32, (tbt, tb), 0)
    col_e = jax.lax.broadcasted_iota(jnp.int32, (tbt, tb), 1)
    e = jnp.logical_and(row_e >= col_e * t, row_e < col_e * t + t).astype(f32)

    # E^T[b, r], generated directly (cheaper than an XLU transpose of `e`).
    row_et = jax.lax.broadcasted_iota(jnp.int32, (tb, tbt), 0)
    col_et = jax.lax.broadcasted_iota(jnp.int32, (tb, tbt), 1)
    et = jnp.logical_and(col_et >= row_et * t, col_et < row_et * t + t).astype(bf16)

    # Within-batch position of each flattened row: pos[r] = r - t * (r // t).
    # r // t is recovered from E with a lane reduction (again no div/mod).
    batch_of_row = jnp.sum(e * col_e.astype(f32), axis=1, keepdims=True)   # (tbt, 1)
    rowf = jax.lax.broadcasted_iota(jnp.int32, (tbt, 1), 0).astype(f32)
    pos = rowf - t * batch_of_row                                          # exact ints
    tcol = jax.lax.broadcasted_iota(jnp.int32, (tbt, t), 1).astype(f32)
    g = (pos == tcol).astype(bf16)                                         # (tbt, t)

    # ---- energy = tanh(enc @ We^T + broadcast(hidden @ Wh^T + bias)) --------------
    # Dominant matmul in bf16 x bf16 with f32 accumulation; the (tiny) hidden
    # projection stays f32 and is accumulated in the same expression, so no separate
    # (tbt, H) broadcast temp is materialized.
    energy = jnp.tanh(
        jnp.dot(enc_ref[...], w2t_ref[...], preferred_element_type=f32)
        + jnp.dot(e, hb_ref[...], preferred_element_type=f32))             # (tbt, H)

    # ---- scores on the MXU, then regroup to a lane-dense (tb, t) tile. ------------
    s_col = jnp.dot(energy.astype(bf16), v_ref[...],
                    preferred_element_type=f32)                            # (tbt, 1)
    s_bt = jnp.dot(et, s_col.astype(bf16) * g,
                   preferred_element_type=f32)                             # (tb, t)

    # ---- numerically-stable softmax over T (lane axis); exact normalization. ------
    m = jnp.max(s_bt, axis=-1, keepdims=True)
    p = jnp.exp(s_bt - m)
    out_ref[...] = (p / jnp.sum(p, axis=-1, keepdims=True)).astype(out_ref.dtype)


def _choose_tb(B, T, H):
    """Batch-tile size TB.

    * B <= 8: one full-dim tile (blocks equal the full array dims, so the (8, 128)
      constraint is trivially satisfied and no padding is wasted).
    * Otherwise TB is a multiple of 8, sized so the per-step working set
      (double-buffered bf16 encoder slab + f32 energy + regroup one-hots) fits a
      conservative ~24 MiB budget (safe within v7x's 64 MiB VMEM), and capped so the
      grid has >= 2 steps whenever B >= 16 so the "parallel" batch axis can shard
      across both TensorCores on v7x.
    """
    if B <= 8:
        return B
    budget = 24 * 1024 * 1024
    # Rough bytes per batch row per grid step:
    #   bf16 enc (x2 buffers) + f32 energy/intermediates + bf16 G share + output.
    per_batch = T * H * (2 * 2 + 2 * 4) + T * T * 2 + T * 4
    tb = budget // max(per_batch, 1)
    tb = max(8, min(512, (tb // 8) * 8))
    bp8 = ((B + 7) // 8) * 8
    if bp8 >= 16:
        tb = min(tb, max(8, (bp8 // 2) // 8 * 8))   # guarantee >= 2 grid steps (v7x)
    return min(tb, bp8)


def attn_forward(hidden, encoder_outputs, attn_weight, attn_bias, v):
    """hidden: (B, H), encoder_outputs: (B, T, H), attn_weight: (H, 2H),
       attn_bias: (H,), v: (H,).  Returns (B, 1, T) attention weights."""
    B, T, H = encoder_outputs.shape
    assert hidden.shape == (B, H)

    # Split the concat Linear: cat([h, enc]) @ W^T + b = h @ Wh^T + enc @ We^T + b.
    wh = attn_weight[:, :H]                      # acts on `hidden`
    we = attn_weight[:, H:]                      # acts on `encoder_outputs`

    # Hoisted hidden projection: one batched XLA matmul, bias folded in (kept f32 —
    # it is only B*H elements, negligible traffic, better accuracy).
    hb = (hidden @ wh.T + attn_bias[None, :]).astype(jnp.float32)           # (B, H)

    # The operands dominating HBM traffic / MXU work are streamed in bf16.
    w2t = we.T.astype(jnp.bfloat16)                                         # (H, H)
    v_col = v.reshape(H, 1).astype(jnp.bfloat16)                            # (H, 1)

    TB = _choose_tb(B, T, H)
    Bp = ((B + TB - 1) // TB) * TB
    if Bp != B:
        hb = jnp.pad(hb, ((0, Bp - B), (0, 0)))
        encoder_outputs = jnp.pad(encoder_outputs, ((0, Bp - B), (0, 0), (0, 0)))
    enc_flat = encoder_outputs.reshape(Bp * T, H).astype(jnp.bfloat16)      # free reshape

    flops = (2 * Bp * T * H * H          # enc @ We^T
             + 2 * Bp * T * TB * H       # one-hot broadcast of the hidden projection
             + 2 * Bp * T * H            # energy @ v
             + 2 * Bp * T * T * TB)      # score regroup
    transcendentals = Bp * T * H + Bp * T
    bytes_accessed = (Bp * T * H * 2 + Bp * H * 4 + H * H * 2 + H * 2 + Bp * T * 4)

    out = pl.pallas_call(
        partial(_attn_kernel, tb=TB, t=T),
        out_shape=jax.ShapeDtypeStruct((Bp, T), jnp.float32),
        grid_spec=pltpu.PrefetchScalarGridSpec(
            num_scalar_prefetch=0,
            grid=(Bp // TB,),
            in_specs=[
                pl.BlockSpec((TB, H), lambda i: (i, 0)),       # hidden projection
                pl.BlockSpec((TB * T, H), lambda i: (i, 0)),   # flattened enc (bf16)
                pl.BlockSpec((H, H), lambda i: (0, 0)),        # We^T (bf16, grid-inv)
                pl.BlockSpec((H, 1), lambda i: (0, 0)),        # v column (bf16)
            ],
            out_specs=pl.BlockSpec((TB, T), lambda i: (i, 0)),
        ),
        compiler_params=pltpu.CompilerParams(
            dimension_semantics=("parallel",),        # batch-tile axis: both TCs on v7x
            vmem_limit_bytes=48 * 1024 * 1024,        # above 16/32 MiB defaults, < v7x 64
        ),
        cost_estimate=pl.CostEstimate(
            flops=int(flops),
            transcendentals=int(transcendentals),
            bytes_accessed=int(bytes_accessed),
        ),
    )(hb, enc_flat, w2t, v_col)

    # Lane-dense (Bp, T) kernel output; (B, 1, T) is a free reshape (no transpose).
    return out[:B].reshape(B, 1, T)


def attn_reference(hidden, encoder_outputs, attn_weight, attn_bias, v):
    """Pure-JAX f32 reference mirroring the PyTorch forward."""
    B, T, H = encoder_outputs.shape
    Hrep = jnp.broadcast_to(hidden[:, None, :], (B, T, H))
    cat = jnp.concatenate([Hrep, encoder_outputs], axis=2)          # (B, T, 2H)
    energy = jnp.tanh(cat @ attn_weight.T + attn_bias)              # (B, T, H)
    scores = jnp.einsum("bth,h->bt", energy, v)                     # (B, T)
    return jax.nn.softmax(scores, axis=1)[:, None, :]               # (B, 1, T)


if __name__ == "__main__":
    B, T, H = 2, 8, 32

    key = jax.random.PRNGKey(0)
    k_hid, k_enc, k_w, k_b, k_v = jax.random.split(key, 5)

    hidden = jax.random.normal(k_hid, (B, H), dtype=jnp.float32)
    encoder_outputs = jax.random.normal(k_enc, (B, T, H), dtype=jnp.float32)

    # Deterministic parameter init matching the module's shapes:
    #   nn.Linear(2H, H): weight (H, 2H), bias (H,)  (uniform in +-1/sqrt(2H))
    #   v: (H,) normal with std 1/sqrt(H)
    lin_bound = 1.0 / math.sqrt(2 * H)
    attn_weight = jax.random.uniform(k_w, (H, 2 * H), minval=-lin_bound,
                                     maxval=lin_bound, dtype=jnp.float32)
    attn_bias = jax.random.uniform(k_b, (H,), minval=-lin_bound,
                                   maxval=lin_bound, dtype=jnp.float32)
    v = (1.0 / math.sqrt(H)) * jax.random.normal(k_v, (H,), dtype=jnp.float32)

    out = attn_forward(hidden, encoder_outputs, attn_weight, attn_bias, v)
    out = jax.block_until_ready(out)

    ref = attn_reference(hidden, encoder_outputs, attn_weight, attn_bias, v)
    assert out.shape == (B, 1, T)
    # bf16 operand streaming (requested by the perf review) bounds accuracy at the
    # ~1e-3..1e-2 level; the softmax normalization itself is exact (no approx recip).
    assert jnp.allclose(out, ref, atol=2e-2, rtol=2e-2), "mismatch vs reference"
    assert jnp.allclose(out.sum(axis=-1), 1.0, atol=1e-5), "softmax rows must sum to 1"

    print("KERNEL_OK")
</pallas_src>

<mosaic_0001>
module attributes {stable_mosaic.version = 11 : i64} {
  func.func @_attn_kernel(%arg0: i32, %arg1: memref<2x32xf32, #tpu.memory_space<vmem>>, %arg2: memref<16x32xbf16, #tpu.memory_space<vmem>>, %arg3: memref<32x32xbf16, #tpu.memory_space<vmem>>, %arg4: memref<32x1xbf16, #tpu.memory_space<vmem>>, %arg5: memref<2x8xf32, #tpu.memory_space<vmem>>) attributes {dimension_semantics = [#tpu.dimension_semantics<parallel>], iteration_bounds = array<i64: 1>, scalar_prefetch = 0 : i64, scratch_operands = 0 : i64, tpu.core_type = #tpu.core_type<tc>, window_params = [{transform_indices = @transform_0, window_bounds = array<i64: 2, 32>}, {transform_indices = @transform_1, window_bounds = array<i64: 16, 32>}, {pipeline_mode = #tpu.pipeline_mode<synchronous>, transform_indices = @transform_2, window_bounds = array<i64: 32, 32>}, {pipeline_mode = #tpu.pipeline_mode<synchronous>, transform_indices = @transform_3, window_bounds = array<i64: 32, 1>}, {transform_indices = @transform_4, window_bounds = array<i64: 2, 8>}]} {
    %0 = tpu.iota {dimensions = array<i32: 0>} : vector<16x2xi32>
    %1 = tpu.iota {dimensions = array<i32: 1>} : vector<16x2xi32>
    %c8_i32 = arith.constant 8 : i32
    %2 = vector.broadcast %c8_i32 : i32 to vector<16x2xi32>
    %3 = arith.muli %1, %2 : vector<16x2xi32>
    %4 = arith.cmpi sge, %0, %3 : vector<16x2xi32>
    %c8_i32_0 = arith.constant 8 : i32
    %5 = vector.broadcast %c8_i32_0 : i32 to vector<16x2xi32>
    %6 = arith.muli %1, %5 : vector<16x2xi32>
    %c8_i32_1 = arith.constant 8 : i32
    %7 = vector.broadcast %c8_i32_1 : i32 to vector<16x2xi32>
    %8 = arith.addi %6, %7 : vector<16x2xi32>
    %9 = arith.cmpi slt, %0, %8 : vector<16x2xi32>
    %10 = arith.andi %4, %9 : vector<16x2xi1>
    %11 = arith.extui %10 : vector<16x2xi1> to vector<16x2xi32>
    %12 = arith.sitofp %11 : vector<16x2xi32> to vector<16x2xf32>
    %13 = tpu.iota {dimensions = array<i32: 0>} : vector<2x16xi32>
    %14 = tpu.iota {dimensions = array<i32: 1>} : vector<2x16xi32>
    %c8_i32_2 = arith.constant 8 : i32
    %15 = vector.broadcast %c8_i32_2 : i32 to vector<2x16xi32>
    %16 = arith.muli %13, %15 : vector<2x16xi32>
    %17 = arith.cmpi sge, %14, %16 : vector<2x16xi32>
    %c8_i32_3 = arith.constant 8 : i32
    %18 = vector.broadcast %c8_i32_3 : i32 to vector<2x16xi32>
    %19 = arith.muli %13, %18 : vector<2x16xi32>
    %c8_i32_4 = arith.constant 8 : i32
    %20 = vector.broadcast %c8_i32_4 : i32 to vector<2x16xi32>
    %21 = arith.addi %19, %20 : vector<2x16xi32>
    %22 = arith.cmpi slt, %14, %21 : vector<2x16xi32>
    %23 = arith.andi %17, %22 : vector<2x16xi1>
    %24 = arith.extui %23 : vector<2x16xi1> to vector<2x16xi32>
    %25 = arith.sitofp %24 : vector<2x16xi32> to vector<2x16xf32>
    %26 = arith.truncf %25 : vector<2x16xf32> to vector<2x16xbf16>
    %27 = arith.sitofp %1 : vector<16x2xi32> to vector<16x2xf32>
    %28 = arith.mulf %12, %27 : vector<16x2xf32>
    %cst = arith.constant dense<0.000000e+00> : vector<16xf32>
    %29 = vector.multi_reduction <add>, %28, %cst [1] : vector<16x2xf32> to vector<16xf32>
    %30 = vector.shape_cast %29 : vector<16xf32> to vector<16x1xf32>
    %31 = tpu.iota {dimensions = array<i32: 0>} : vector<16x1xi32>
    %32 = arith.sitofp %31 : vector<16x1xi32> to vector<16x1xf32>
    %cst_5 = arith.constant 8.000000e+00 : f32
    %33 = vector.broadcast %cst_5 : f32 to vector<16x1xf32>
    %34 = arith.mulf %33, %30 : vector<16x1xf32>
    %35 = arith.subf %32, %34 : vector<16x1xf32>
    %36 = tpu.iota {dimensions = array<i32: 1>} : vector<16x8xi32>
    %37 = arith.sitofp %36 : vector<16x8xi32> to vector<16x8xf32>
    %38 = vector.broadcast %35 : vector<16x1xf32> to vector<16x8xf32>
    %39 = arith.cmpf oeq, %38, %37 : vector<16x8xf32>
    %40 = arith.extui %39 : vector<16x8xi1> to vector<16x8xi32>
    %41 = arith.sitofp %40 : vector<16x8xi32> to vector<16x8xf32>
    %42 = arith.truncf %41 : vector<16x8xf32> to vector<16x8xbf16>
    %c0 = arith.constant 0 : index
    %c0_6 = arith.constant 0 : index
    %43 = vector.load %arg2[%c0, %c0_6] : memref<16x32xbf16, #tpu.memory_space<vmem>>, vector<16x32xbf16>
    %c0_7 = arith.constant 0 : index
    %c0_8 = arith.constant 0 : index
    %44 = vector.load %arg3[%c0_7, %c0_8] : memref<32x32xbf16, #tpu.memory_space<vmem>>, vector<32x32xbf16>
    %cst_9 = arith.constant dense<0.000000e+00> : vector<16x32xf32>
    %45 = tpu.matmul %43, %44, %cst_9 {dimension_numbers = #tpu.dot_dimension_numbers<[1], [0], [0], [1], [0, 0, 1, 1], [], []>} : vector<16x32xbf16>, vector<32x32xbf16>, vector<16x32xf32> -> vector<16x32xf32>
    %c0_10 = arith.constant 0 : index
    %c0_11 = arith.constant 0 : index
    %46 = vector.load %arg1[%c0_10, %c0_11] : memref<2x32xf32, #tpu.memory_space<vmem>>, vector<2x32xf32>
    %cst_12 = arith.constant dense<0.000000e+00> : vector<16x32xf32>
    %47 = tpu.matmul %12, %46, %cst_12 {dimension_numbers = #tpu.dot_dimension_numbers<[1], [0], [0], [1], [0, 0, 1, 1], [], []>} : vector<16x2xf32>, vector<2x32xf32>, vector<16x32xf32> -> vector<16x32xf32>
    %48 = arith.addf %45, %47 : vector<16x32xf32>
    %49 = math.tanh %48 : vector<16x32xf32>
    %50 = arith.truncf %49 : vector<16x32xf32> to vector<16x32xbf16>
    %c0_13 = arith.constant 0 : index
    %c0_14 = arith.constant 0 : index
    %51 = vector.load %arg4[%c0_13, %c0_14] : memref<32x1xbf16, #tpu.memory_space<vmem>>, vector<32x1xbf16>
    %cst_15 = arith.constant dense<0.000000e+00> : vector<16x1xf32>
    %52 = tpu.matmul %50, %51, %cst_15 {dimension_numbers = #tpu.dot_dimension_numbers<[1], [0], [0], [1], [0, 0, 1, 1], [], []>} : vector<16x32xbf16>, vector<32x1xbf16>, vector<16x1xf32> -> vector<16x1xf32>
    %53 = arith.truncf %52 : vector<16x1xf32> to vector<16x1xbf16>
    %54 = vector.broadcast %53 : vector<16x1xbf16> to vector<16x8xbf16>
    %55 = arith.mulf %54, %42 : vector<16x8xbf16>
    %cst_16 = arith.constant dense<0.000000e+00> : vector<2x8xf32>
    %56 = tpu.matmul %26, %55, %cst_16 {dimension_numbers = #tpu.dot_dimension_numbers<[1], [0], [0], [1], [0, 0, 1, 1], [], []>} : vector<2x16xbf16>, vector<16x8xbf16>, vector<2x8xf32> -> vector<2x8xf32>
    %cst_17 = arith.constant dense<0xFF800000> : vector<2xf32>
    %57 = vector.multi_reduction <maximumf>, %56, %cst_17 [1] : vector<2x8xf32> to vector<2xf32>
    %58 = vector.shape_cast %57 : vector<2xf32> to vector<2x1xf32>
    %59 = vector.broadcast %58 : vector<2x1xf32> to vector<2x8xf32>
    %60 = arith.subf %56, %59 : vector<2x8xf32>
    %61 = math.exp %60 : vector<2x8xf32>
    %cst_18 = arith.constant dense<0.000000e+00> : vector<2xf32>
    %62 = vector.multi_reduction <add>, %61, %cst_18 [1] : vector<2x8xf32> to vector<2xf32>
    %63 = vector.shape_cast %62 : vector<2xf32> to vector<2x1xf32>
    %64 = vector.broadcast %63 : vector<2x1xf32> to vector<2x8xf32>
    %65 = arith.divf %61, %64 : vector<2x8xf32>
    %c0_19 = arith.constant 0 : index
    %c0_20 = arith.constant 0 : index
    %66 = vector.load %arg5[%c0_19, %c0_20] : memref<2x8xf32, #tpu.memory_space<vmem>>, vector<2x8xf32>
    tpu.vector_store %arg5[%c0_19, %c0_20], %65 {strides = array<i32>} : memref<2x8xf32, #tpu.memory_space<vmem>>, vector<2x8xf32>,
    return
  }
  func.func @transform_0(%arg0: i32) -> (i32, i32) {
    %c0_i32 = arith.constant 0 : i32
    %c0_i32_0 = arith.constant 0 : i32
    return %arg0, %c0_i32 : i32, i32
  }
  func.func @transform_1(%arg0: i32) -> (i32, i32) {
    %c0_i32 = arith.constant 0 : i32
    %c0_i32_0 = arith.constant 0 : i32
    return %arg0, %c0_i32 : i32, i32
  }
  func.func @transform_2(%arg0: i32) -> (i32, i32) {
    %c0_i32 = arith.constant 0 : i32
    %c0_i32_0 = arith.constant 0 : i32
    %c0_i32_1 = arith.constant 0 : i32
    return %c0_i32, %c0_i32_0 : i32, i32
  }
  func.func @transform_3(%arg0: i32) -> (i32, i32) {
    %c0_i32 = arith.constant 0 : i32
    %c0_i32_0 = arith.constant 0 : i32
    %c0_i32_1 = arith.constant 0 : i32
    return %c0_i32, %c0_i32_0 : i32, i32
  }
  func.func @transform_4(%arg0: i32) -> (i32, i32) {
    %c0_i32 = arith.constant 0 : i32
    %c0_i32_0 = arith.constant 0 : i32
    return %arg0, %c0_i32 : i32, i32
  }
}

</mosaic_0001>

<llo_original>
// kernel: tpu_custom_call.1
$region0: #{tpu_custom_call.1}
  #allocation0 [shape = 'u32[]', space=smem, size = 0x4, offset = 0x4, fixed_abs, tag = 'smem constant byte address 0x4 - core index']
  #allocation1 [shape = 'u32[144,128]{1,0:T(1,128)}', space=vmem, size = 0x12000, scoped, tag = 'internal scratch']
  %s0 = inlined_call_operand.vmem [shape: f32[2,32], index: 0, kind: input, shape index: {}]
  %s1 = inlined_call_operand.hbm [shape: bf16[16,32], index: 1, kind: input, shape index: {}]
  %s2 = inlined_call_operand.vmem [shape: bf16[32,32], index: 2, kind: input, shape index: {}]
  %s3 = inlined_call_operand.vmem [shape: bf16[32,1], index: 3, kind: input, shape index: {}]
  %s4 = inlined_call_operand.hbm [shape: f32[2,8], index: 4, kind: output, shape index: {}]
  %s5 = sld [smem:[#allocation0]]
  $region30: #{tpu_custom_call.1} parent=0
    _
  %s7 = ssub.s32 1, %s5
  %s8 = scalar_select 0, %s7, %s5
  $region1: #{tpu_custom_call.1} parent=0
    #allocation2 [shape = 'u8[4096]{0}', space=vmem, size = 0x1000, scoped, tag = 'input window, operand 1, single buffered']
    #allocation3 [shape = 's32[1]{0}', space=sflag, size = 0x4, scoped, tag = 'scoped memory for tpu_custom_call.1']
    #allocation4 [shape = 's32[1]{0}', space=sflag, size = 0x4, scoped, tag = 'scoped memory for tpu_custom_call.1']
    #allocation5 [shape = 'u8[1024]{0}', space=vmem, size = 0x400, scoped, tag = 'output window, operand 0, single buffered']
    %9 = vsyncpa [#allocation3], 0
    %10 = vsyncpa [#allocation4], 0
    // Predicated region
    $region2: #{tpu_custom_call.1} parent=1 // pred_check
      _
    $region3: #{tpu_custom_call.1} parent=1 // pred_check_branch
      %12 = sbr.rel (0) target = $region5
    $region4: #{tpu_custom_call.1} parent=1 // pred_region
      _
    $region5: #{tpu_custom_call.1} parent=1 // pred_fallthru
      _
    // Predicated region
    $region6: #{tpu_custom_call.1} parent=1 // pred_check
      _
    $region7: #{tpu_custom_call.1} parent=1 // pred_check_branch
      %14 = sbr.rel (0) target = $region9
    $region8: #{tpu_custom_call.1} parent=1 // pred_region
      %s16 = ssub.s32 128, 128
      %17 = vsyncadd [#allocation3], %s16
      %s18 = sshll.u32 [#allocation2], 4
      %s19 = int_to_ptr.vmem [resolvable:$true] %s18
      %24 = dma.hbm_to_vmem [thread:$0]  %s1, 128, %s19, [#allocation3], 64, 64, 4
    $region9: #{tpu_custom_call.1} parent=1 // pred_fallthru
      _
    // Predicated region
    $region10: #{tpu_custom_call.1} parent=1 // pred_check
      _
    $region11: #{tpu_custom_call.1} parent=1 // pred_check_branch
      %26 = sbr.rel (0) target = $region13
    $region12: #{tpu_custom_call.1} parent=1 // pred_region
      _
    $region13: #{tpu_custom_call.1} parent=1 // pred_fallthru
      _
    // Predicated region
    $region14: #{tpu_custom_call.1} parent=1 // pred_check
      _
    $region15: #{tpu_custom_call.1} parent=1 // pred_check_branch
      %28 = sbr.rel (0) target = $region17
    $region16: #{tpu_custom_call.1} parent=1 // pred_region
      _
    $region17: #{tpu_custom_call.1} parent=1 // pred_fallthru
      _
    // Predicated region
    $region18: #{tpu_custom_call.1} parent=1 // pred_check
      _
    $region19: #{tpu_custom_call.1} parent=1 // pred_check_branch
      %30 = sbr.rel (0) target = $region21
    $region20: #{tpu_custom_call.1} parent=1 // pred_region
      %31 = dma.done [#allocation3], 128
    $region21: #{tpu_custom_call.1} parent=1 // pred_fallthru
      _
    %v33 = vlaneseq
    %v34 = vshrl.u32 %v33, 7
    %v35 = vadd.s32 %v34, 8
    %v36 = vlaneseq
    %v37 = vand.u32 %v36, 127
    %v38 = vmul.u32 %v37, 8
    %vm39 = vcmp.ge.s32.totalorder %v34, %v38
    %vm40 = vcmp.ge.s32.totalorder %v35, %v38
    %v41 = vadd.s32 %v38, 8
    %vm42 = vcmp.lt.s32.totalorder %v34, %v41
    %vm43 = vcmp.lt.s32.totalorder %v35, %v41
    %vm44 = vmand %vm39, %vm42
    %vm45 = vmand %vm40, %vm43
    %v46 = vsel %vm44, 1, 0
    %v47 = vsel %vm45, 1, 0
    %v48 = vcvt.s32.f32 %v46
    %v49 = vcvt.s32.f32 %v47
    %v50 = vmul.u32 %v34, 8
    %vm51 = vcmp.ge.s32.totalorder %v37, %v50
    %v52 = vadd.s32 %v50, 8
    %vm53 = vcmp.lt.s32.totalorder %v37, %v52
    %vm54 = vmand %vm51, %vm53
    %v55 = vsel %vm54, 1, 0
    %v56 = vcvt.s32.f32 %v55
    %v57 = vpack.c.bf16 %v56, %v56
    %v58 = vcvt.s32.f32 %v37
    %v59 = vmul.f32 %v48, %v58
    %v60 = vmul.f32 %v49, %v58
    %vm61 = vcmask 15360
    %v62 = vsel %vm61, %v59, 0.0
    %63 = vadd.xlane.f32.xlu0 %v62
    %v64 = vpop.xlane.xlu0 %63
    %v65 = vsel %vm61, %v60, 0.0
    %66 = vadd.xlane.f32.xlu0 %v65
    %v67 = vpop.xlane.xlu0 %66
    %v68 = vcvt.s32.f32 %v34
    %v69 = vcvt.s32.f32 %v35
    %v70 = vmul.f32 %v64, 8.0
    %v71 = vmul.f32 %v67, 8.0
    %v72 = vsub.f32 %v68, %v70
    %v73 = vsub.f32 %v69, %v71
    %vm74 = vcmp.eq.f32.partialorder %v72, %v58
    %vm75 = vcmp.eq.f32.partialorder %v73, %v58
    %v76 = vsel %vm74, 1, 0
    %v77 = vsel %vm75, 1, 0
    %v78 = vcvt.s32.f32 %v76
    %v79 = vcvt.s32.f32 %v77
    %v80 = vpack.c.bf16 %v79, %v78
    %v81 = vld [vmem:[#allocation2] sm:$0xf]
    %v82 = vld [vmem:[#allocation2 + $0x4] sm:$0xf]
    %v83 = vld [vmem:[%s2] sm:$0xf]
    %v84 = vld [vmem:[%s2 + $0x4] sm:$0xf]
    %v85 = vld [vmem:[%s2 + $0x8] sm:$0xf]
    %v86 = vld [vmem:[%s2 + $0xc] sm:$0xf]
    %v87 = vld [vmem:[%s0] sm:$0x3]
    %v89 = vsel %vm61, %v48, 0
    %v92 = vsel %vm61, %v49, 0
    %vm94 = vcmask 1041408
    %v96 = vsel %vm94, %v87, 0
    %98 = vmatprep.subr.mxu0 0.0
    %99 = vmatpush1.msra.mxu0 0.0
    %100 = vmatprep.subr.mxu0 0.0
    %101 = vmatpush1.msra.mxu0 0.0
    %102 = vmatprep.subr.mxu0 0.0
    %103 = vmatpush1.msra.mxu0 0.0
    %104 = vmatprep.subr.mxu0 0.0
    %105 = vmatpush1.msra.mxu0 0.0
    %106 = vmatprep.subr.mxu0 0.0
    %107 = vmatpush1.msra.mxu0 0.0
    %108 = vmatprep.subr.mxu0 0.0
    %109 = vmatpush1.msra.mxu0 0.0
    %110 = vmatprep.subr.mxu0 0.0
    %111 = vmatpush1.msra.mxu0 0.0
    %112 = vmatprep.subr.mxu0 0.0
    %113 = vmatpush1.msra.mxu0 0.0
    %114 = vmatprep.subr.mxu0 0.0
    %115 = vmatpush1.msra.mxu0 0.0
    %116 = vmatprep.subr.mxu0 0.0
    %117 = vmatpush1.msra.mxu0 0.0
    %118 = vmatprep.subr.mxu0 0.0
    %119 = vmatpush1.msra.mxu0 0.0
    %120 = vmatprep.subr.mxu0 0.0
    %121 = vmatpush1.msra.mxu0 0.0
    %122 = vmatprep.subr.mxu0 0.0
    %123 = vmatpush1.msra.mxu0 0.0
    %124 = vmatprep.subr.mxu0 0.0
    %125 = vmatpush1.msra.mxu0 0.0
    %126 = vmatprep.subr.mxu0 0.0
    %127 = vmatpush1.msra.mxu0 0.0
    %128 = vmatprep.subr.mxu0 0.0
    %129 = vmatpush1.msra.mxu0 %v96
    %130 = vmatprep.subr.mxu0 0.0
    %131 = vmatpush2.msra.mxu0 0.0
    %132 = vmatprep.subr.mxu0 0.0
    %133 = vmatpush2.msra.mxu0 0.0
    %134 = vmatprep.subr.mxu0 0.0
    %135 = vmatpush2.msra.mxu0 0.0
    %136 = vmatprep.subr.mxu0 0.0
    %137 = vmatpush2.msra.mxu0 0.0
    %138 = vmatprep.subr.mxu0 0.0
    %139 = vmatpush2.msra.mxu0 0.0
    %140 = vmatprep.subr.mxu0 0.0
    %141 = vmatpush2.msra.mxu0 0.0
    %142 = vmatprep.subr.mxu0 0.0
    %143 = vmatpush2.msra.mxu0 0.0
    %144 = vmatprep.subr.mxu0 0.0
    %145 = vmatpush2.msra.mxu0 0.0
    %146 = vmatprep.subr.mxu0 0.0
    %147 = vmatpush2.msra.mxu0 0.0
    %148 = vmatprep.subr.mxu0 0.0
    %149 = vmatpush2.msra.mxu0 0.0
    %150 = vmatprep.subr.mxu0 0.0
    %151 = vmatpush2.msra.mxu0 0.0
    %152 = vmatprep.subr.mxu0 0.0
    %153 = vmatpush2.msra.mxu0 0.0
    %154 = vmatprep.subr.mxu0 0.0
    %155 = vmatpush2.msra.mxu0 0.0
    %156 = vmatprep.subr.mxu0 0.0
    %157 = vmatpush2.msra.mxu0 0.0
    %158 = vmatprep.subr.mxu0 0.0
    %159 = vmatpush2.msra.mxu0 0.0
    %160 = vmatprep.subr.mxu0 0.0
    %161 = vmatpush2.msra.mxu0 0.0
    %162 = vmatprep.mubr.f32.mxu0 0.0
    %163 = vmatmul.mubr.f32.gmra.mxu0 %v89
    %v164 = vpop.f32.mrf.mxu0
    %v165 = vadd.f32 0.0, %v164
    %v166 = vpop.f32.mrf.mxu0
    %167 = vmatprep.mubr.f32.mxu0 0.0
    %168 = vmatmul.mubr.f32.gmra.mxu0 %v92
    %v169 = vpop.f32.mrf.mxu0
    %v170 = vadd.f32 0.0, %v169
    %v171 = vpop.f32.mrf.mxu0
    %172 = vdwg.mxu0
    %v175 = vunpack.c.l.b16 %v81
    %v176 = vunpack.c.l.b16 %v82
    %v177 = vpack.c.b16 %v176, %v175
    %v182 = vunpack.c.l.b16 %v83
    %v183 = vunpack.c.l.b16 %v84
    %v184 = vunpack.c.l.b16 %v85
    %v185 = vunpack.c.l.b16 %v86
    %v186 = vpack.c.b16 %v183, %v182
    %v187 = vpack.c.b16 %v185, %v184
    %vm190 = vcmask 261120
    %v192 = vsel %vm190, %v177, 0
    %194 = vmatprep.subr.bf16.mxu0 0
    %195 = vmatpush1.bf16.msra.mxu0 0
    %196 = vmatprep.subr.bf16.mxu0 0
    %197 = vmatpush1.bf16.msra.mxu0 0
    %198 = vmatprep.subr.bf16.mxu0 0
    %199 = vmatpush1.bf16.msra.mxu0 0
    %200 = vmatprep.subr.bf16.mxu0 0
    %201 = vmatpush1.bf16.msra.mxu0 0
    %202 = vmatprep.subr.bf16.mxu0 0
    %203 = vmatpush1.bf16.msra.mxu0 0
    %204 = vmatprep.subr.bf16.mxu0 0
    %205 = vmatpush1.bf16.msra.mxu0 0
    %206 = vmatprep.subr.bf16.mxu0 0
    %207 = vmatpush1.bf16.msra.mxu0 %v187
    %208 = vmatprep.subr.bf16.mxu0 0
    %209 = vmatpush1.bf16.msra.mxu0 %v186
    %210 = vmatprep.subr.bf16.mxu0 0
    %211 = vmatpush2.bf16.msra.mxu0 0
    %212 = vmatprep.subr.bf16.mxu0 0
    %213 = vmatpush2.bf16.msra.mxu0 0
    %214 = vmatprep.subr.bf16.mxu0 0
    %215 = vmatpush2.bf16.msra.mxu0 0
    %216 = vmatprep.subr.bf16.mxu0 0
    %217 = vmatpush2.bf16.msra.mxu0 0
    %218 = vmatprep.subr.bf16.mxu0 0
    %219 = vmatpush2.bf16.msra.mxu0 0
    %220 = vmatprep.subr.bf16.mxu0 0
    %221 = vmatpush2.bf16.msra.mxu0 0
    %222 = vmatprep.subr.bf16.mxu0 0
    %223 = vmatpush2.bf16.msra.mxu0 0
    %224 = vmatprep.subr.bf16.mxu0 0
    %225 = vmatpush2.bf16.msra.mxu0 0
    %226 = vmatprep.mubr.bf16.mxu0 0
    %227 = vmatmul.mubr.bf16.gmra.mxu0 %v192
    %v228 = vpop.f32.mrf.mxu0
    %v229 = vadd.f32 %v165, %v228
    %v230 = vpop.f32.mrf.mxu0
    %v231 = vpop.f32.mrf.mxu0
    %v232 = vadd.f32 %v170, %v231
    %v233 = vpop.f32.mrf.mxu0
    %234 = vdwg.mxu0
    %v235 = vtanh.pop %v229
    %v236 = vtanh.pop %v232
    %v237 = vpack.c.bf16 %v236, %v235
    %v238 = vld [vmem:[%s3] sm:$0xf]
    %v239 = vld [vmem:[%s3 + $0x4] sm:$0xf]
    %v240 = vld [vmem:[%s3 + $0x8] sm:$0xf]
    %v241 = vld [vmem:[%s3 + $0xc] sm:$0xf]
    %v246 = vunpack.c.l.b16 %v238
    %v247 = vunpack.c.l.b16 %v239
    %v248 = vunpack.c.l.b16 %v240
    %v249 = vunpack.c.l.b16 %v241
    %v250 = vpack.c.b16 %v247, %v246
    %v251 = vpack.c.b16 %v249, %v248
    %v255 = vsel %vm190, %v237, 0
    %257 = vmatprep.subr.bf16.mxu0 0
    %258 = vmatpush1.bf16.msra.mxu0 0
    %259 = vmatprep.subr.bf16.mxu0 0
    %260 = vmatpush1.bf16.msra.mxu0 0
    %261 = vmatprep.subr.bf16.mxu0 0
    %262 = vmatpush1.bf16.msra.mxu0 0
    %263 = vmatprep.subr.bf16.mxu0 0
    %264 = vmatpush1.bf16.msra.mxu0 0
    %265 = vmatprep.subr.bf16.mxu0 0
    %266 = vmatpush1.bf16.msra.mxu0 0
    %267 = vmatprep.subr.bf16.mxu0 0
    %268 = vmatpush1.bf16.msra.mxu0 0
    %269 = vmatprep.subr.bf16.mxu0 0
    %270 = vmatpush1.bf16.msra.mxu0 %v251
    %271 = vmatprep.subr.bf16.mxu0 0
    %272 = vmatpush1.bf16.msra.mxu0 %v250
    %273 = vmatprep.subr.bf16.mxu0 0
    %274 = vmatpush2.bf16.msra.mxu0 0
    %275 = vmatprep.subr.bf16.mxu0 0
    %276 = vmatpush2.bf16.msra.mxu0 0
    %277 = vmatprep.subr.bf16.mxu0 0
    %278 = vmatpush2.bf16.msra.mxu0 0
    %279 = vmatprep.subr.bf16.mxu0 0
    %280 = vmatpush2.bf16.msra.mxu0 0
    %281 = vmatprep.subr.bf16.mxu0 0
    %282 = vmatpush2.bf16.msra.mxu0 0
    %283 = vmatprep.subr.bf16.mxu0 0
    %284 = vmatpush2.bf16.msra.mxu0 0
    %285 = vmatprep.subr.bf16.mxu0 0
    %286 = vmatpush2.bf16.msra.mxu0 0
    %287 = vmatprep.subr.bf16.mxu0 0
    %288 = vmatpush2.bf16.msra.mxu0 0
    %289 = vmatprep.mubr.bf16.mxu0 0
    %290 = vmatmul.mubr.bf16.gmra.mxu0 %v255
    %v291 = vpop.f32.mrf.mxu0
    %v292 = vadd.f32 0.0, %v291
    %v293 = vpop.f32.mrf.mxu0
    %v294 = vpop.f32.mrf.mxu0
    %v295 = vadd.f32 0.0, %v294
    %v296 = vpop.f32.mrf.mxu0
    %297 = vdwg.mxu0
    %v298 = vpack.c.bf16 %v295, %v292
    %300 = vset.pattern.permute.xlu0 0
    %301 = vperm.xlu0 %300, %v298
    %v302 = vpop.permute.xlu0 %301
    %v304 = vmul.bf16 %v302, %v80
    %vm305 = vcmask 130048
    %v307 = vsel %vm305, %v57, 0
    %309 = vmatprep.subr.bf16.mxu0 0
    %310 = vmatpush1.bf16.msra.mxu0 0
    %311 = vmatprep.subr.bf16.mxu0 0
    %312 = vmatpush1.bf16.msra.mxu0 0
    %313 = vmatprep.subr.bf16.mxu0 0
    %314 = vmatpush1.bf16.msra.mxu0 0
    %315 = vmatprep.subr.bf16.mxu0 0
    %316 = vmatpush1.bf16.msra.mxu0 0
    %317 = vmatprep.subr.bf16.mxu0 0
    %318 = vmatpush1.bf16.msra.mxu0 0
    %319 = vmatprep.subr.bf16.mxu0 0
    %320 = vmatpush1.bf16.msra.mxu0 0
    %321 = vmatprep.subr.bf16.mxu0 0
    %322 = vmatpush1.bf16.msra.mxu0 0
    %323 = vmatprep.subr.bf16.mxu0 0
    %324 = vmatpush1.bf16.msra.mxu0 %v304
    %325 = vmatprep.subr.bf16.mxu0 0
    %326 = vmatpush2.bf16.msra.mxu0 0
    %327 = vmatprep.subr.bf16.mxu0 0
    %328 = vmatpush2.bf16.msra.mxu0 0
    %329 = vmatprep.subr.bf16.mxu0 0
    %330 = vmatpush2.bf16.msra.mxu0 0
    %331 = vmatprep.subr.bf16.mxu0 0
    %332 = vmatpush2.bf16.msra.mxu0 0
    %333 = vmatprep.subr.bf16.mxu0 0
    %334 = vmatpush2.bf16.msra.mxu0 0
    %335 = vmatprep.subr.bf16.mxu0 0
    %336 = vmatpush2.bf16.msra.mxu0 0
    %337 = vmatprep.subr.bf16.mxu0 0
    %338 = vmatpush2.bf16.msra.mxu0 0
    %339 = vmatprep.subr.bf16.mxu0 0
    %340 = vmatpush2.bf16.msra.mxu0 0
    %341 = vmatprep.mubr.bf16.mxu0 0
    %342 = vmatmul.mubr.bf16.gmra.mxu0 %v307
    %v343 = vpop.f32.mrf.mxu0
    %v344 = vadd.f32 0.0, %v343
    %v345 = vpop.f32.mrf.mxu0
    %v346 = vpop.f32.mrf.mxu0
    %v347 = vpop.f32.mrf.mxu0
    %348 = vdwg.mxu0
    %vm349 = vcmask 58368
    %v350 = vsel %vm349, %v344, -inf
    %351 = vmax.xlane.f32.xlu0 %v350
    %v352 = vpop.xlane.xlu0 %351
    %v353 = vsub.f32 %v344, %v352
    %v354 = vmul.f32 %v353, 1.442695
    %v355 = vpow.pop %v354
    %v356 = vsel %vm349, %v355, 0.0
    %357 = vadd.xlane.f32.xlu0 %v356
    %v358 = vpop.xlane.xlu0 %357
    %v359 = vrcp.pop %v358
    %v360 = vmul.f32 %v355, %v359
    %361 = vst.msk [vmem:[#allocation5] sm:$0x3] %vm349, %v360
    // Predicated region
    $region22: #{tpu_custom_call.1} parent=1 // pred_check
      _
    $region23: #{tpu_custom_call.1} parent=1 // pred_check_branch
      %363 = sbr.rel (0) target = $region25
    $region24: #{tpu_custom_call.1} parent=1 // pred_region
      %s365 = ssub.s32 32, 32
      %366 = vsyncadd [#allocation4], %s365
      %s368 = sshll.u32 [#allocation5], 4
      %s369 = int_to_ptr.vmem [resolvable:$true] %s368
      %371 = dma.vmem_to_hbm [thread:$0]  %s369, 32, %s4, [#allocation4]
    $region25: #{tpu_custom_call.1} parent=1 // pred_fallthru
      _
    // Predicated region
    $region26: #{tpu_custom_call.1} parent=1 // pred_check
      _
    $region27: #{tpu_custom_call.1} parent=1 // pred_check_branch
      %373 = sbr.rel (0) target = $region29
    $region28: #{tpu_custom_call.1} parent=1 // pred_region
      %374 = dma.done [#allocation4], 32
    $region29: #{tpu_custom_call.1} parent=1 // pred_fallthru
      _
    %375 = vsyncpa [#allocation3], 1
    %376 = vsyncpa [#allocation4], 1

</llo_original>
